<compile_context>
chip_gen: v7x
topology: tpu7x:2x2x1
jax: 0.10.0
libtpu: 0.0.40
codegen_flags: <defaults>
</compile_context>

<pallas_src>
import functools

import jax
import jax.numpy as jnp
from jax.experimental import pallas as pl
from jax.experimental.pallas import tpu as pltpu


def _snake(a):
    # Snake activation: a + sin(a)^2.  sin once (EUP), square on the VPU.
    s = jnp.sin(a)
    return a + s * s


def _make_fcblock_kernel(n_splits):
    """Kernel body factory.  x stays f32 in VMEM (exact residual); it is cast
    to bf16 only as the MXU operand.  For small nf the batch tile is split
    into `n_splits` independent chains so one chain's Snake can overlap the
    other's matmul (the LLO scheduler interleaves the independent chains)."""

    def kernel(x_ref, w1_ref, b1_ref, w2_ref, b2_ref, w3_ref, b3_ref, o_ref):
        tb = x_ref.shape[0]
        sub = tb // n_splits
        w1, w2, w3 = w1_ref[...], w2_ref[...], w3_ref[...]
        b1, b2, b3 = b1_ref[...], b2_ref[...], b3_ref[...]
        for j in range(n_splits):                      # static unroll
            rows = pl.ds(j * sub, sub)
            y = jnp.dot(x_ref[rows, :].astype(w1.dtype), w1,
                        preferred_element_type=jnp.float32) + b1
            y = _snake(y)
            y = jnp.dot(y.astype(w2.dtype), w2,
                        preferred_element_type=jnp.float32) + b2
            y = _snake(y)
            y = jnp.dot(y.astype(w3.dtype), w3,
                        preferred_element_type=jnp.float32) + b3
            # Exact-f32 residual: re-read x from VMEM here instead of keeping
            # a live f32 copy across all three matmuls.
            y = _snake(x_ref[rows, :] + y)
            o_ref[rows, :] = y.astype(o_ref.dtype)

    return kernel


@functools.cache
def _buffered_one_supported():
    """Feature-detect pl.Buffered(1) on pallas_call inputs with a tiny probe
    (avoids a broad try/except around the real kernel that would mask real
    errors such as VMEM OOM)."""
    def copy_kernel(x_ref, o_ref):
        o_ref[...] = x_ref[...]

    try:
        x = jnp.zeros((8, 128), jnp.float32)
        out = pl.pallas_call(
            copy_kernel,
            out_shape=jax.ShapeDtypeStruct((8, 128), jnp.float32),
            grid=(1,),
            in_specs=[pl.BlockSpec((8, 128), lambda i: (0, 0),
                                   pipeline_mode=pl.Buffered(1))],
            out_specs=pl.BlockSpec((8, 128), lambda i: (0, 0)),
        )(x)
        jax.block_until_ready(out)
        return True
    except Exception:
        return False


@functools.cache
def _vmem_plan():
    """(vmem_limit_bytes, planning_budget_bytes), generation-aware with
    headroom for Mosaic scratch/DMA descriptors (v5e/v6e: 128 MiB per TC,
    v7x: 64 MiB per TC)."""
    try:
        cap = int(pltpu.get_tpu_info().vmem_capacity_bytes)
    except Exception:
        cap = 64 * 1024 * 1024          # conservative: v7x per-TC VMEM
    limit = int(cap * 0.85)             # ~15% headroom under physical VMEM
    budget = int(cap * 0.72)            # what _choose_tb plans against
    return limit, budget


def _choose_tb(B, nf, budget, weight_buffers):
    """Batch tile: largest that fits the VMEM budget, with an nf-dependent row
    cap (small nf is per-step-overhead bound -> bigger tiles), aligned to
    MXU/sublane-friendly multiples, dividing B, preferring an even step count
    (v7x megacore)."""
    # Resident bytes: bf16 weights (x weight_buffers) + f32 biases, plus per
    # batch row: f32 x tile (x2 buffers), out tile (x2 buffers), ~4 live f32
    # intermediates per chain.
    fixed = weight_buffers * (3 * nf * nf * 2 + 3 * nf * 4)
    per_row = nf * (2 * 4 + 2 * 4 + 4 * 4)
    if nf <= 256:
        row_cap = 2048
    elif nf <= 512:
        row_cap = 1024
    else:
        row_cap = 512
    cap = (budget - fixed) // max(per_row, 1)
    # TODO(synk): if the three bf16 weights alone exceed the budget (v7x:
    # nf >~ 2800), tile the feature dimension with a VMEM f32 accumulator
    # instead of the fully-fused single-block form.
    cap = int(max(8, min(cap, row_cap, B)))
    if cap >= B:
        return B
    for align in (256, 128, 16, 8):
        cands = [t for t in range(cap, align - 1, -1)
                 if B % t == 0 and t % align == 0]
        if cands:
            even = [t for t in cands if (B // t) % 2 == 0]
            return even[0] if even else cands[0]
    return B   # no aligned divisor: single full-array block (always legal)


def _pallas_fcblock(x, w1, b1, w2, b2, w3, b3, *, tb, n_splits,
                    single_buffer_consts, vmem_limit_bytes):
    B, nf = x.shape
    out_dtype = x.dtype

    const_kwargs = ({"pipeline_mode": pl.Buffered(1)}
                    if single_buffer_consts else {})
    w_spec = pl.BlockSpec((nf, nf), lambda i: (0, 0), **const_kwargs)
    b_spec = pl.BlockSpec((1, nf), lambda i: (0, 0), **const_kwargs)

    x_bytes = B * nf * jnp.dtype(x.dtype).itemsize
    out_bytes = B * nf * jnp.dtype(out_dtype).itemsize
    cost = pl.CostEstimate(
        flops=6 * B * nf * nf,              # 3 matmuls, 2*B*nf*nf flops each
        transcendentals=3 * B * nf,         # 3 Snake sin passes
        bytes_accessed=x_bytes + out_bytes + 3 * nf * nf * 2 + 3 * nf * 4,
    )

    # Megacore gate: on v7x a "parallel" batch split makes both TCs DMA their
    # own copy of all three weights; only worth it when compute dominates.
    batch_sem = "parallel" if B >= 2 * nf else "arbitrary"

    # TODO(synk): for large nf (>= 2048) on v5e, hide the weight-DMA prologue
    # by moving w2/w3 to memory_space=pl.ANY and overlapping their
    # make_async_copy with fc1 of grid step 0.
    return pl.pallas_call(
        _make_fcblock_kernel(n_splits),
        out_shape=jax.ShapeDtypeStruct((B, nf), out_dtype),
        grid_spec=pltpu.PrefetchScalarGridSpec(
            num_scalar_prefetch=0,
            grid=(B // tb,),
            in_specs=[
                pl.BlockSpec((tb, nf), lambda i: (i, 0)),   # x tile (f32)
                w_spec, b_spec,                             # fc1
                w_spec, b_spec,                             # fc2
                w_spec, b_spec,                             # fc3
            ],
            out_specs=pl.BlockSpec((tb, nf), lambda i: (i, 0)),
        ),
        compiler_params=pltpu.CompilerParams(
            dimension_semantics=(batch_sem,),
            vmem_limit_bytes=vmem_limit_bytes,
        ),
        cost_estimate=cost,
    )(x, w1, b1, w2, b2, w3, b3)


def prepare_params(params):
    """One-time dtype preparation (call once at param-load time and cache):
    bf16 weights for the MXU, f32 biases added to the f32 accumulator."""
    return {
        "w1": params["w1"].astype(jnp.bfloat16),
        "w2": params["w2"].astype(jnp.bfloat16),
        "w3": params["w3"].astype(jnp.bfloat16),
        "b1": params["b1"].astype(jnp.float32),
        "b2": params["b2"].astype(jnp.float32),
        "b3": params["b3"].astype(jnp.float32),
    }


def fcblock(x, params, *, tb=None):
    """x: [B, nf] (float32).  params: dict with w1,b1,w2,b2,w3,b3 (w_i stored
    [in, out], i.e. torch weight transposed; b_i: [1, nf]).  Pass the result
    of prepare_params() to avoid any per-call dtype conversion ops."""
    B, nf = x.shape
    p = prepare_params(params)          # no-op casts if already prepared
    single = _buffered_one_supported()
    vmem_limit, budget = _vmem_plan()
    if tb is None:
        tb = _choose_tb(B, nf, budget, weight_buffers=1 if single else 2)
    assert B % tb == 0, f"batch {B} must be divisible by tile {tb}"
    # Interleave two independent half-tiles for small nf so Snake (VPU/EUP)
    # hides under the other half's matmul; needs >=16-row sub-tiles.
    n_splits = 2 if (nf <= 512 and tb % 32 == 0) else 1
    return _pallas_fcblock(x, p["w1"], p["b1"], p["w2"], p["b2"],
                           p["w3"], p["b3"], tb=tb, n_splits=n_splits,
                           single_buffer_consts=single,
                           vmem_limit_bytes=vmem_limit)


def init_params(key, nf):
    """Deterministic init mimicking nn.Linear's uniform(-1/sqrt(nf), 1/sqrt(nf))."""
    bound = 1.0 / (nf ** 0.5)
    keys = jax.random.split(key, 6)

    def u(k, shape):
        return jax.random.uniform(k, shape, jnp.float32, -bound, bound)

    # Weights stored as [in, out] (torch weight transposed).
    return {
        "w1": u(keys[0], (nf, nf)), "b1": u(keys[1], (1, nf)),
        "w2": u(keys[2], (nf, nf)), "b2": u(keys[3], (1, nf)),
        "w3": u(keys[4], (nf, nf)), "b3": u(keys[5], (1, nf)),
    }


def fcblock_ref(x, params, *, operand_dtype=jnp.float32):
    """Pure-JAX reference of the PyTorch forward.  With
    operand_dtype=jnp.bfloat16 it reproduces the kernel's precision policy
    (bf16 matmul operands, f32 accumulation, exact f32 residual/Snake)."""
    c = lambda a: a.astype(operand_dtype)
    prec = jax.lax.Precision.HIGHEST if operand_dtype == jnp.float32 else None

    def dot(a, b):
        return jnp.dot(a, b, preferred_element_type=jnp.float32, precision=prec)

    xf = x.astype(jnp.float32)
    y = dot(c(x), c(params["w1"])) + params["b1"].astype(jnp.float32)
    y = _snake(y)
    y = dot(c(y), c(params["w2"])) + params["b2"].astype(jnp.float32)
    y = _snake(y)
    y = dot(c(y), c(params["w3"])) + params["b3"].astype(jnp.float32)
    y = _snake(xf + y)
    return y.astype(x.dtype)


if __name__ == "__main__":
    key = jax.random.PRNGKey(0)

    def run_case(B, nf, tb=None):
        kx, kp = jax.random.split(jax.random.fold_in(key, B * 1000 + nf))
        x = jax.random.normal(kx, (B, nf), jnp.float32)
        params = init_params(kp, nf)
        prepared = prepare_params(params)       # one-time dtype prep, reused

        out = jax.block_until_ready(fcblock(x, prepared, tb=tb))
        assert out.shape == (B, nf) and out.dtype == x.dtype

        # Matched-precision reference (bf16 operands, f32 acc, f32 residual).
        ref_lo = fcblock_ref(x, params, operand_dtype=jnp.bfloat16)
        assert jnp.allclose(out, ref_lo, atol=1e-2, rtol=1e-2), \
            f"mismatch vs bf16-matched reference at B={B}, nf={nf}"

        # Full-precision reference: loose tolerance covers bf16 operand rounding.
        ref_f32 = fcblock_ref(x, params)
        assert jnp.allclose(out, ref_f32, atol=2e-1, rtol=1e-1), \
            f"mismatch vs f32 reference at B={B}, nf={nf}"

    # Toy size matching the module (blocks equal full array dims, one chain).
    run_case(B=8, nf=32)
    # Multi-step grid (2 steps) with two interleaved 16-row half-tiles.
    run_case(B=64, nf=128, tb=32)

    print("KERNEL_OK")
</pallas_src>

<mosaic_0001>
module attributes {stable_mosaic.version = 11 : i64} {
  func.func @copy_kernel(%arg0: i32, %arg1: memref<8x128xf32, #tpu.memory_space<vmem>>, %arg2: memref<8x128xf32, #tpu.memory_space<vmem>>) attributes {dimension_semantics = [#tpu.dimension_semantics<arbitrary>], iteration_bounds = array<i64: 1>, scalar_prefetch = 0 : i64, scratch_operands = 0 : i64, tpu.core_type = #tpu.core_type<tc>, window_params = [{pipeline_mode = #tpu.pipeline_mode<synchronous>, transform_indices = @transform_0, window_bounds = array<i64: 8, 128>}, {pipeline_mode = #tpu.pipeline_mode<synchronous>, transform_indices = @transform_1, window_bounds = array<i64: 8, 128>}]} {
    %c0 = arith.constant 0 : index
    %c0_0 = arith.constant 0 : index
    %0 = vector.load %arg1[%c0, %c0_0] : memref<8x128xf32, #tpu.memory_space<vmem>>, vector<8x128xf32>
    %c0_1 = arith.constant 0 : index
    %c0_2 = arith.constant 0 : index
    %1 = vector.load %arg2[%c0_1, %c0_2] : memref<8x128xf32, #tpu.memory_space<vmem>>, vector<8x128xf32>
    tpu.vector_store %arg2[%c0_1, %c0_2], %0 {strides = array<i32>} : memref<8x128xf32, #tpu.memory_space<vmem>>, vector<8x128xf32>,
    return
  }
  func.func @transform_0(%arg0: i32) -> (i32, i32) {
    %c0_i32 = arith.constant 0 : i32
    %c0_i32_0 = arith.constant 0 : i32
    %c0_i32_1 = arith.constant 0 : i32
    return %c0_i32, %c0_i32_0 : i32, i32
  }
  func.func @transform_1(%arg0: i32) -> (i32, i32) {
    %c0_i32 = arith.constant 0 : i32
    %c0_i32_0 = arith.constant 0 : i32
    %c0_i32_1 = arith.constant 0 : i32
    return %c0_i32, %c0_i32_0 : i32, i32
  }
}

module attributes {stable_mosaic.version = 11 : i64} {
  func.func @kernel(%arg0: i32, %arg1: memref<8x32xf32, #tpu.memory_space<vmem>>, %arg2: memref<32x32xbf16, #tpu.memory_space<vmem>>, %arg3: memref<1x32xf32, #tpu.memory_space<vmem>>, %arg4: memref<32x32xbf16, #tpu.memory_space<vmem>>, %arg5: memref<1x32xf32, #tpu.memory_space<vmem>>, %arg6: memref<32x32xbf16, #tpu.memory_space<vmem>>, %arg7: memref<1x32xf32, #tpu.memory_space<vmem>>, %arg8: memref<8x32xf32, #tpu.memory_space<vmem>>) attributes {dimension_semantics = [#tpu.dimension_semantics<arbitrary>], iteration_bounds = array<i64: 1>, scalar_prefetch = 0 : i64, scratch_operands = 0 : i64, tpu.core_type = #tpu.core_type<tc>, window_params = [{transform_indices = @transform_0, window_bounds = array<i64: 8, 32>}, {pipeline_mode = #tpu.pipeline_mode<synchronous>, transform_indices = @transform_1, window_bounds = array<i64: 32, 32>}, {pipeline_mode = #tpu.pipeline_mode<synchronous>, transform_indices = @transform_2, window_bounds = array<i64: 1, 32>}, {pipeline_mode = #tpu.pipeline_mode<synchronous>, transform_indices = @transform_3, window_bounds = array<i64: 32, 32>}, {pipeline_mode = #tpu.pipeline_mode<synchronous>, transform_indices = @transform_4, window_bounds = array<i64: 1, 32>}, {pipeline_mode = #tpu.pipeline_mode<synchronous>, transform_indices = @transform_5, window_bounds = array<i64: 32, 32>}, {pipeline_mode = #tpu.pipeline_mode<synchronous>, transform_indices = @transform_6, window_bounds = array<i64: 1, 32>}, {transform_indices = @transform_7, window_bounds = array<i64: 8, 32>}]} {
    %c0 = arith.constant 0 : index
    %c0_0 = arith.constant 0 : index
    %0 = vector.load %arg2[%c0, %c0_0] : memref<32x32xbf16, #tpu.memory_space<vmem>>, vector<32x32xbf16>
    %c0_1 = arith.constant 0 : index
    %c0_2 = arith.constant 0 : index
    %1 = vector.load %arg4[%c0_1, %c0_2] : memref<32x32xbf16, #tpu.memory_space<vmem>>, vector<32x32xbf16>
    %c0_3 = arith.constant 0 : index
    %c0_4 = arith.constant 0 : index
    %2 = vector.load %arg6[%c0_3, %c0_4] : memref<32x32xbf16, #tpu.memory_space<vmem>>, vector<32x32xbf16>
    %c0_5 = arith.constant 0 : index
    %c0_6 = arith.constant 0 : index
    %3 = vector.load %arg3[%c0_5, %c0_6] : memref<1x32xf32, #tpu.memory_space<vmem>>, vector<1x32xf32>
    %c0_7 = arith.constant 0 : index
    %c0_8 = arith.constant 0 : index
    %4 = vector.load %arg5[%c0_7, %c0_8] : memref<1x32xf32, #tpu.memory_space<vmem>>, vector<1x32xf32>
    %c0_9 = arith.constant 0 : index
    %c0_10 = arith.constant 0 : index
    %5 = vector.load %arg7[%c0_9, %c0_10] : memref<1x32xf32, #tpu.memory_space<vmem>>, vector<1x32xf32>
    %c0_11 = arith.constant 0 : index
    %c0_12 = arith.constant 0 : index
    %6 = vector.load %arg1[%c0_11, %c0_12] : memref<8x32xf32, #tpu.memory_space<vmem>>, vector<8x32xf32>
    %7 = arith.truncf %6 : vector<8x32xf32> to vector<8x32xbf16>
    %cst = arith.constant dense<0.000000e+00> : vector<8x32xf32>
    %8 = tpu.matmul %7, %0, %cst {dimension_numbers = #tpu.dot_dimension_numbers<[1], [0], [0], [1], [0, 0, 1, 1], [], []>} : vector<8x32xbf16>, vector<32x32xbf16>, vector<8x32xf32> -> vector<8x32xf32>
    %9 = vector.broadcast %3 : vector<1x32xf32> to vector<8x32xf32>
    %10 = arith.addf %8, %9 : vector<8x32xf32>
    %11 = math.sin %10 : vector<8x32xf32>
    %12 = arith.mulf %11, %11 : vector<8x32xf32>
    %13 = arith.addf %10, %12 : vector<8x32xf32>
    %14 = arith.truncf %13 : vector<8x32xf32> to vector<8x32xbf16>
    %cst_13 = arith.constant dense<0.000000e+00> : vector<8x32xf32>
    %15 = tpu.matmul %14, %1, %cst_13 {dimension_numbers = #tpu.dot_dimension_numbers<[1], [0], [0], [1], [0, 0, 1, 1], [], []>} : vector<8x32xbf16>, vector<32x32xbf16>, vector<8x32xf32> -> vector<8x32xf32>
    %16 = vector.broadcast %4 : vector<1x32xf32> to vector<8x32xf32>
    %17 = arith.addf %15, %16 : vector<8x32xf32>
    %18 = math.sin %17 : vector<8x32xf32>
    %19 = arith.mulf %18, %18 : vector<8x32xf32>
    %20 = arith.addf %17, %19 : vector<8x32xf32>
    %21 = arith.truncf %20 : vector<8x32xf32> to vector<8x32xbf16>
    %cst_14 = arith.constant dense<0.000000e+00> : vector<8x32xf32>
    %22 = tpu.matmul %21, %2, %cst_14 {dimension_numbers = #tpu.dot_dimension_numbers<[1], [0], [0], [1], [0, 0, 1, 1], [], []>} : vector<8x32xbf16>, vector<32x32xbf16>, vector<8x32xf32> -> vector<8x32xf32>
    %23 = vector.broadcast %5 : vector<1x32xf32> to vector<8x32xf32>
    %24 = arith.addf %22, %23 : vector<8x32xf32>
    %c0_15 = arith.constant 0 : index
    %c0_16 = arith.constant 0 : index
    %25 = vector.load %arg1[%c0_15, %c0_16] : memref<8x32xf32, #tpu.memory_space<vmem>>, vector<8x32xf32>
    %26 = arith.addf %25, %24 : vector<8x32xf32>
    %27 = math.sin %26 : vector<8x32xf32>
    %28 = arith.mulf %27, %27 : vector<8x32xf32>
    %29 = arith.addf %26, %28 : vector<8x32xf32>
    %c0_17 = arith.constant 0 : index
    %c0_18 = arith.constant 0 : index
    %30 = vector.load %arg8[%c0_17, %c0_18] : memref<8x32xf32, #tpu.memory_space<vmem>>, vector<8x32xf32>
    tpu.vector_store %arg8[%c0_17, %c0_18], %29 {strides = array<i32>} : memref<8x32xf32, #tpu.memory_space<vmem>>, vector<8x32xf32>,
    return
  }
  func.func @transform_0(%arg0: i32) -> (i32, i32) {
    %c0_i32 = arith.constant 0 : i32
    %c0_i32_0 = arith.constant 0 : i32
    return %arg0, %c0_i32 : i32, i32
  }
  func.func @transform_1(%arg0: i32) -> (i32, i32) {
    %c0_i32 = arith.constant 0 : i32
    %c0_i32_0 = arith.constant 0 : i32
    %c0_i32_1 = arith.constant 0 : i32
    return %c0_i32, %c0_i32_0 : i32, i32
  }
  func.func @transform_2(%arg0: i32) -> (i32, i32) {
    %c0_i32 = arith.constant 0 : i32
    %c0_i32_0 = arith.constant 0 : i32
    %c0_i32_1 = arith.constant 0 : i32
    return %c0_i32, %c0_i32_0 : i32, i32
  }
  func.func @transform_3(%arg0: i32) -> (i32, i32) {
    %c0_i32 = arith.constant 0 : i32
    %c0_i32_0 = arith.constant 0 : i32
    %c0_i32_1 = arith.constant 0 : i32
    return %c0_i32, %c0_i32_0 : i32, i32
  }
  func.func @transform_4(%arg0: i32) -> (i32, i32) {
    %c0_i32 = arith.constant 0 : i32
    %c0_i32_0 = arith.constant 0 : i32
    %c0_i32_1 = arith.constant 0 : i32
    return %c0_i32, %c0_i32_0 : i32, i32
  }
  func.func @transform_5(%arg0: i32) -> (i32, i32) {
    %c0_i32 = arith.constant 0 : i32
    %c0_i32_0 = arith.constant 0 : i32
    %c0_i32_1 = arith.constant 0 : i32
    return %c0_i32, %c0_i32_0 : i32, i32
  }
  func.func @transform_6(%arg0: i32) -> (i32, i32) {
    %c0_i32 = arith.constant 0 : i32
    %c0_i32_0 = arith.constant 0 : i32
    %c0_i32_1 = arith.constant 0 : i32
    return %c0_i32, %c0_i32_0 : i32, i32
  }
  func.func @transform_7(%arg0: i32) -> (i32, i32) {
    %c0_i32 = arith.constant 0 : i32
    %c0_i32_0 = arith.constant 0 : i32
    return %arg0, %c0_i32 : i32, i32
  }
}

</mosaic_0001>

<llo_original>
// kernel: tpu_custom_call.1
$region0: #{tpu_custom_call.1}
  #allocation0 [shape = 'u32[]', space=smem, size = 0x4, offset = 0x4, fixed_abs, tag = 'smem constant byte address 0x4 - core index']
  #allocation1 [shape = 'u32[144,128]{1,0:T(1,128)}', space=vmem, size = 0x12000, scoped, tag = 'internal scratch']
  %s0 = inlined_call_operand.hbm [shape: f32[8,128], index: 0, kind: input, shape index: {}]
  %s1 = inlined_call_operand.hbm [shape: f32[8,128], index: 1, kind: output, shape index: {}]
  %s2 = sld [smem:[#allocation0]]
  $region18: #{tpu_custom_call.1} parent=0
    _
  %s4 = ssub.s32 1, %s2
  %s5 = scalar_select 0, %s4, %s2
  $region1: #{tpu_custom_call.1} parent=0
    #allocation2 [shape = 'u8[4096]{0}', space=vmem, size = 0x1000, scoped, tag = 'input window, operand 0, single buffered']
    #allocation3 [shape = 's32[1]{0}', space=sflag, size = 0x4, scoped, tag = 'scoped memory for tpu_custom_call.1']
    #allocation4 [shape = 's32[1]{0}', space=sflag, size = 0x4, scoped, tag = 'scoped memory for tpu_custom_call.1']
    #allocation5 [shape = 'u8[4096]{0}', space=vmem, size = 0x1000, scoped, tag = 'output window, operand 0, single buffered']
    %6 = vsyncpa [#allocation3], 0
    %7 = vsyncpa [#allocation4], 0
    // Predicated region
    $region2: #{tpu_custom_call.1} parent=1 // pred_check
      _
    $region3: #{tpu_custom_call.1} parent=1 // pred_check_branch
      %9 = sbr.rel (0) target = $region5
    $region4: #{tpu_custom_call.1} parent=1 // pred_region
      %s11 = ssub.s32 128, 128
      %12 = vsyncadd [#allocation3], %s11
      %s14 = sshll.u32 [#allocation2], 4
      %s15 = int_to_ptr.vmem [resolvable:$true] %s14
      %17 = dma.hbm_to_vmem [thread:$0]  %s0, 128, %s15, [#allocation3]
    $region5: #{tpu_custom_call.1} parent=1 // pred_fallthru
      _
    // Predicated region
    $region6: #{tpu_custom_call.1} parent=1 // pred_check
      _
    $region7: #{tpu_custom_call.1} parent=1 // pred_check_branch
      %19 = sbr.rel (0) target = $region9
    $region8: #{tpu_custom_call.1} parent=1 // pred_region
      %20 = dma.done [#allocation3], 128
    $region9: #{tpu_custom_call.1} parent=1 // pred_fallthru
      _
    %v21 = vld [vmem:[#allocation2] sm:$0xff]
    %22 = vst [vmem:[#allocation5] sm:$0xff] %v21
    // Predicated region
    $region10: #{tpu_custom_call.1} parent=1 // pred_check
      _
    $region11: #{tpu_custom_call.1} parent=1 // pred_check_branch
      %24 = sbr.rel (0) target = $region13
    $region12: #{tpu_custom_call.1} parent=1 // pred_region
      %s26 = ssub.s32 128, 128
      %27 = vsyncadd [#allocation4], %s26
      %s29 = sshll.u32 [#allocation5], 4
      %s30 = int_to_ptr.vmem [resolvable:$true] %s29
      %32 = dma.vmem_to_hbm [thread:$0]  %s30, 128, %s1, [#allocation4]
    $region13: #{tpu_custom_call.1} parent=1 // pred_fallthru
      _
    // Predicated region
    $region14: #{tpu_custom_call.1} parent=1 // pred_check
      _
    $region15: #{tpu_custom_call.1} parent=1 // pred_check_branch
      %34 = sbr.rel (0) target = $region17
    $region16: #{tpu_custom_call.1} parent=1 // pred_region
      %35 = dma.done [#allocation4], 128
    $region17: #{tpu_custom_call.1} parent=1 // pred_fallthru
      _
    %36 = vsyncpa [#allocation3], 1
    %37 = vsyncpa [#allocation4], 1

// kernel: tpu_custom_call.1
$region0: #{tpu_custom_call.1}
  #allocation0 [shape = 'u32[]', space=smem, size = 0x4, offset = 0x4, fixed_abs, tag = 'smem constant byte address 0x4 - core index']
  #allocation1 [shape = 'u32[144,128]{1,0:T(1,128)}', space=vmem, size = 0x12000, scoped, tag = 'internal scratch']
  %s0 = inlined_call_operand.hbm [shape: f32[8,32], index: 0, kind: input, shape index: {}]
  %s1 = inlined_call_operand.hbm [shape: bf16[32,32], index: 1, kind: input, shape index: {}]
  %s2 = inlined_call_operand.vmem [shape: f32[1,32], index: 2, kind: input, shape index: {}]
  %s3 = inlined_call_operand.hbm [shape: bf16[32,32], index: 3, kind: input, shape index: {}]
  %s4 = inlined_call_operand.vmem [shape: f32[1,32], index: 4, kind: input, shape index: {}]
  %s5 = inlined_call_operand.vmem [shape: bf16[32,32], index: 5, kind: input, shape index: {}]
  %s6 = inlined_call_operand.vmem [shape: f32[1,32], index: 6, kind: input, shape index: {}]
  %s7 = inlined_call_operand.hbm [shape: f32[8,32], index: 7, kind: output, shape index: {}]
  %s8 = sld [smem:[#allocation0]]
  $region50: #{tpu_custom_call.1} parent=0
    _
  %s10 = ssub.s32 1, %s8
  %s11 = scalar_select 0, %s10, %s8
  $region1: #{tpu_custom_call.1} parent=0
    #allocation2 [shape = 'u8[4096]{0}', space=vmem, size = 0x1000, scoped, tag = 'input window, operand 0, single buffered']
    #allocation3 [shape = 's32[1]{0}', space=sflag, size = 0x4, scoped, tag = 'scoped memory for tpu_custom_call.1']
    #allocation4 [shape = 's32[1]{0}', space=sflag, size = 0x4, scoped, tag = 'scoped memory for tpu_custom_call.1']
    #allocation5 [shape = 'u8[8192]{0}', space=vmem, size = 0x2000, scoped, tag = 'input window, operand 1, single buffered']
    #allocation6 [shape = 's32[1]{0}', space=sflag, size = 0x4, scoped, tag = 'scoped memory for tpu_custom_call.1']
    #allocation7 [shape = 'u8[8192]{0}', space=vmem, size = 0x2000, scoped, tag = 'input window, operand 3, single buffered']
    #allocation8 [shape = 'u8[4096]{0}', space=vmem, size = 0x1000, scoped, tag = 'output window, operand 0, single buffered']
    %12 = vsyncpa [#allocation3], 0
    %13 = vsyncpa [#allocation6], 0
    %14 = vsyncpa [#allocation4], 0
    // Predicated region
    $region2: #{tpu_custom_call.1} parent=1 // pred_check
      _
    $region3: #{tpu_custom_call.1} parent=1 // pred_check_branch
      %16 = sbr.rel (0) target = $region5
    $region4: #{tpu_custom_call.1} parent=1 // pred_region
      %s18 = ssub.s32 128, 128
      %19 = vsyncadd [#allocation3], %s18
      %s21 = sshll.u32 [#allocation2], 4
      %s22 = int_to_ptr.vmem [resolvable:$true] %s21
      %24 = dma.hbm_to_vmem [thread:$0]  %s0, 128, %s22, [#allocation3]
    $region5: #{tpu_custom_call.1} parent=1 // pred_fallthru
      _
    // Predicated region
    $region6: #{tpu_custom_call.1} parent=1 // pred_check
      _
    $region7: #{tpu_custom_call.1} parent=1 // pred_check_branch
      %26 = sbr.rel (0) target = $region9
    $region8: #{tpu_custom_call.1} parent=1 // pred_region
      %s28 = ssub.s32 256, 256
      %29 = vsyncadd [#allocation6], %s28
      %s30 = sshll.u32 [#allocation5], 4
      %s31 = int_to_ptr.vmem [resolvable:$true] %s30
      %36 = dma.hbm_to_vmem [thread:$0]  %s1, 256, %s31, [#allocation6], 64, 64, 4
    $region9: #{tpu_custom_call.1} parent=1 // pred_fallthru
      _
    // Predicated region
    $region10: #{tpu_custom_call.1} parent=1 // pred_check
      _
    $region11: #{tpu_custom_call.1} parent=1 // pred_check_branch
      %38 = sbr.rel (0) target = $region13
    $region12: #{tpu_custom_call.1} parent=1 // pred_region
      _
    $region13: #{tpu_custom_call.1} parent=1 // pred_fallthru
      _
    // Predicated region
    $region14: #{tpu_custom_call.1} parent=1 // pred_check
      _
    $region15: #{tpu_custom_call.1} parent=1 // pred_check_branch
      %40 = sbr.rel (0) target = $region17
    $region16: #{tpu_custom_call.1} parent=1 // pred_region
      %s42 = ssub.s32 256, 256
      %43 = vsyncadd [#allocation6], %s42
      %s44 = sshll.u32 [#allocation7], 4
      %s45 = int_to_ptr.vmem [resolvable:$true] %s44
      %50 = dma.hbm_to_vmem [thread:$0]  %s3, 256, %s45, [#allocation6], 64, 64, 4
    $region17: #{tpu_custom_call.1} parent=1 // pred_fallthru
      _
    // Predicated region
    $region18: #{tpu_custom_call.1} parent=1 // pred_check
      _
    $region19: #{tpu_custom_call.1} parent=1 // pred_check_branch
      %52 = sbr.rel (0) target = $region21
    $region20: #{tpu_custom_call.1} parent=1 // pred_region
      _
    $region21: #{tpu_custom_call.1} parent=1 // pred_fallthru
      _
    // Predicated region
    $region22: #{tpu_custom_call.1} parent=1 // pred_check
      _
    $region23: #{tpu_custom_call.1} parent=1 // pred_check_branch
      %54 = sbr.rel (0) target = $region25
    $region24: #{tpu_custom_call.1} parent=1 // pred_region
      _
    $region25: #{tpu_custom_call.1} parent=1 // pred_fallthru
      _
    // Predicated region
    $region26: #{tpu_custom_call.1} parent=1 // pred_check
      _
    $region27: #{tpu_custom_call.1} parent=1 // pred_check_branch
      %56 = sbr.rel (0) target = $region29
    $region28: #{tpu_custom_call.1} parent=1 // pred_region
      _
    $region29: #{tpu_custom_call.1} parent=1 // pred_fallthru
      _
    // Predicated region
    $region30: #{tpu_custom_call.1} parent=1 // pred_check
      _
    $region31: #{tpu_custom_call.1} parent=1 // pred_check_branch
      %58 = sbr.rel (0) target = $region33
    $region32: #{tpu_custom_call.1} parent=1 // pred_region
      %59 = dma.done [#allocation3], 128
    $region33: #{tpu_custom_call.1} parent=1 // pred_fallthru
      _
    // Predicated region
    $region34: #{tpu_custom_call.1} parent=1 // pred_check
      _
    $region35: #{tpu_custom_call.1} parent=1 // pred_check_branch
      %61 = sbr.rel (0) target = $region37
    $region36: #{tpu_custom_call.1} parent=1 // pred_region
      %62 = dma.done [#allocation6], 256
    $region37: #{tpu_custom_call.1} parent=1 // pred_fallthru
      _
    // Predicated region
    $region38: #{tpu_custom_call.1} parent=1 // pred_check
      _
    $region39: #{tpu_custom_call.1} parent=1 // pred_check_branch
      %64 = sbr.rel (0) target = $region41
    $region40: #{tpu_custom_call.1} parent=1 // pred_region
      %65 = dma.done [#allocation6], 256
    $region41: #{tpu_custom_call.1} parent=1 // pred_fallthru
      _
    %v67 = vld [vmem:[#allocation5] sm:$0xf]
    %v68 = vld [vmem:[#allocation5 + $0x4] sm:$0xf]
    %v69 = vld [vmem:[#allocation5 + $0x8] sm:$0xf]
    %v70 = vld [vmem:[#allocation5 + $0xc] sm:$0xf]
    %v71 = vld [vmem:[#allocation7] sm:$0xf]
    %v72 = vld [vmem:[#allocation7 + $0x4] sm:$0xf]
    %v73 = vld [vmem:[#allocation7 + $0x8] sm:$0xf]
    %v74 = vld [vmem:[#allocation7 + $0xc] sm:$0xf]
    %v75 = vld [vmem:[%s5] sm:$0xf]
    %v76 = vld [vmem:[%s5 + $0x4] sm:$0xf]
    %v77 = vld [vmem:[%s5 + $0x8] sm:$0xf]
    %v78 = vld [vmem:[%s5 + $0xc] sm:$0xf]
    %v79 = vld [vmem:[%s2] sm:$0x1]
    %v80 = vld [vmem:[%s4] sm:$0x1]
    %v81 = vld [vmem:[%s6] sm:$0x1]
    %v82 = vld [vmem:[#allocation2] sm:$0xff]
    %v83 = vpack.c.bf16 %v82, %v82
    %v85 = vlaneseq
    %v86 = vshrl.u32 %v85, 7
    %v87 = vsub.s32 0, %v86
    %v88 = vrot.slane %v79, %v87
    %v94 = vunpack.c.l.b16 %v67
    %v95 = vunpack.c.l.b16 %v68
    %v96 = vunpack.c.l.b16 %v69
    %v97 = vunpack.c.l.b16 %v70
    %v98 = vpack.c.b16 %v95, %v94
    %v99 = vpack.c.b16 %v97, %v96
    %vm102 = vcmask 261120
    %v104 = vsel %vm102, %v83, 0
    %106 = vmatprep.subr.bf16.mxu0 0
    %107 = vmatpush1.bf16.msra.mxu0 %v98
    %108 = vmatprep.subr.bf16.mxu0 0
    %109 = vmatpush1.bf16.msra.mxu0 %v99
    %110 = vmatprep.subr.bf16.mxu0 0
    %111 = vmatpush1.bf16.msra.mxu0 0
    %112 = vmatprep.subr.bf16.mxu0 0
    %113 = vmatpush1.bf16.msra.mxu0 0
    %114 = vmatprep.subr.bf16.mxu0 0
    %115 = vmatpush1.bf16.msra.mxu0 0
    %116 = vmatprep.subr.bf16.mxu0 0
    %117 = vmatpush1.bf16.msra.mxu0 0
    %118 = vmatprep.subr.bf16.mxu0 0
    %119 = vmatpush1.bf16.msra.mxu0 0
    %120 = vmatprep.subr.bf16.mxu0 0
    %121 = vmatpush1.bf16.msra.mxu0 0
    %122 = vmatprep.subr.bf16.mxu0 0
    %123 = vmatpush1.bf16.msra.mxu0 0
    %124 = vmatprep.subr.bf16.mxu0 0
    %125 = vmatpush1.bf16.msra.mxu0 0
    %126 = vmatprep.subr.bf16.mxu0 0
    %127 = vmatpush1.bf16.msra.mxu0 0
    %128 = vmatprep.subr.bf16.mxu0 0
    %129 = vmatpush1.bf16.msra.mxu0 0
    %130 = vmatprep.subr.bf16.mxu0 0
    %131 = vmatpush1.bf16.msra.mxu0 0
    %132 = vmatprep.subr.bf16.mxu0 0
    %133 = vmatpush1.bf16.msra.mxu0 0
    %134 = vmatprep.subr.bf16.mxu0 0
    %135 = vmatpush1.bf16.msra.mxu0 0
    %136 = vmatprep.subr.bf16.mxu0 0
    %137 = vmatpush1.bf16.msra.mxu0 0
    %138 = vmatprep.mubr.bf16.mxu0 0
    %139 = vmatmul.mubr.bf16.gmra.mrb[0].mxu0 %v104
    %v140 = vpop.f32.mrb[0].mxu0
    %v141 = vadd.f32 %v88, %v140
    %v142 = vpop.f32.mrb[0].mxu0
    %v143 = vpop.f32.mrb[0].mxu0
    %v144 = vpop.f32.mrb[0].mxu0
    %145 = vdwg.mxu0
    %v146 = vand.u32 2147483647, %v141
    %vm147 = vcmp.le.f32.partialorder %v146, 0.7853982
    %vm148 = vcmp.lt.s32.totalorder %v141, 0
    %v149 = vand.u32 %v141, 2139095040
    %v150 = vshrl.u32 %v149, 23
    %v151 = vsub.s32 %v150, 127
    %v152 = vand.u32 2147483647, %v141
    %v153 = vand.u32 %v152, 8388607
    %v154 = vor.u32 %v153, 8388608
    %v155 = vsub.s32 0, %v154
    %v156 = vadd.s32 %v151, 1
    %vm157 = vcmp.gt.s32.totalorder %v156, 0
    %v158 = vsel %vm157, %v156, 0
    %v159 = vshrl.u32 %v158, 5
    %v160 = vand.u32 %v158, 31
    %v161 = vsub.s32 32, %v160
    %v162 = vshrl.u32 683565275, %v161
    %v163 = vshll.u32 683565275, %v160
    %v164 = vshrl.u32 2475754826, %v161
    %v165 = vor.u32 %v163, %v164
    %v166 = vshll.u32 2475754826, %v160
    %v167 = vshrl.u32 2131351028, %v161
    %v168 = vor.u32 %v166, %v167
    %v169 = vshll.u32 2131351028, %v160
    %v170 = vshrl.u32 2102212464, %v161
    %v171 = vor.u32 %v169, %v170
    %v172 = vshll.u32 2102212464, %v160
    %v173 = vshrl.u32 920167782, %v161
    %v174 = vor.u32 %v172, %v173
    %v175 = vshll.u32 920167782, %v160
    %v176 = vshrl.u32 1326507024, %v161
    %v177 = vor.u32 %v175, %v176
    %vm178 = vcmp.lt.s32.totalorder %v159, 1
    %vm179 = vcmp.lt.s32.totalorder %v159, 2
    %vm180 = vcmp.lt.s32.totalorder %v159, 3
    %vm181 = vcmp.lt.s32.totalorder %v159, 4
    %v182 = vsel %vm178, %v162, %v165
    %v183 = vsel %vm181, %v171, 2102212464
    %v184 = vsel %vm180, %v168, %v183
    %v185 = vsel %vm179, %v182, %v184
    %v186 = vsel %vm178, %v165, %v168
    %v187 = vsel %vm181, %v174, 920167782
    %v188 = vsel %vm180, %v171, %v187
    %v189 = vsel %vm179, %v186, %v188
    %v190 = vsel %vm178, %v168, %v171
    %v191 = vsel %vm181, %v177, 1326507024
    %v192 = vsel %vm180, %v174, %v191
    %v193 = vsel %vm179, %v190, %v192
    %v194 = vshll.u32 %v154, 8
    %v195 = vmul.u32.u64.compose %v194, %v193
    %v196 = vextract.low.u32 %v195
    %v197 = vextract.high.u32 %v195
    %v198 = vmul.u32.u64.compose %v194, %v189
    %v199 = vextract.low.u32 %v198
    %v200 = vextract.high.u32 %v198
    %v201 = vmul.u32 %v194, %v185
    %v202 = vadd.s32 %v197, %v199
    %vm203 = vc.u32 %v197, %v199
    %v204 = vadd.s32 %v200, 1
    %v205 = vsel %vm203, %v204, %v200
    %v206 = vadd.s32 %v201, %v205
    %v207 = vadd.s32 %v206, 536870912
    %v208 = vshrl.u32 %v207, 30
    %v209 = vshll.u32 %v208, 30
    %v210 = vsub.s32 %v206, %v209
    %vm211 = vcmp.lt.s32.totalorder %v210, 0
    %v212 = vsub.s32 0, %v210
    %v213 = vsel %vm211, %v212, %v210
    %v214 = vclz %v213
    %v215 = vsub.s32 %v214, 2
    %vm216 = vcmp.gt.s32.totalorder 0, %v215
    %v217 = vsel %vm216, 0, %v215
    %v218 = vsub.s32 32, %v217
    %v219 = vshll.u32 %v210, %v217
    %v220 = vshrl.u32 %v202, %v218
    %v221 = vor.u32 %v219, %v220
    %v222 = vsub.s32 4294967266, %v217
    %v223 = vadd.s32 %v222, 127
    %v224 = vshll.u32 %v223, 23
    %v225 = vor.u32 4788187, %v224
    %v226 = vand.u32 2147483647, %v225
    %v228 = vcvt.s32.f32 %v221
    %v229 = vmul.f32 %v228, %v226
    %v230 = vxor.u32 %v229, 2147483648
    %v231 = vsel %vm148, %v230, %v229
    %v232 = vsub.s32 4, %v208
    %v233 = vsel %vm148, %v232, %v208
    %v234 = vsel %vm147, %v141, %v231
    %v235 = vsel %vm147, 0, %v233
    %v236 = vcosq.f32.pop %v234
    %v237 = vsinq.f32.pop %v234
    %vm238 = vweird.f32 %v141
    %v239 = vadd.s32 %v235, 3
    %v240 = vand.u32 %v239, 3
    %vm241 = vcmp.lt.s32.totalorder %v240, 2
    %vm242 = vcmp.eq.s32.totalorder %v240, 0
    %v243 = vxor.u32 %v237, 2147483648
    %v244 = vsel %vm242, %v236, %v243
    %vm245 = vcmp.eq.s32.totalorder %v240, 2
    %v246 = vxor.u32 %v236, 2147483648
    %v247 = vsel %vm245, %v246, %v237
    %v248 = vsel %vm241, %v244, %v247
    %v249 = vsel %vm238, nan, %v248
    %v250 = vmul.f32 %v249, %v249
    %v251 = vadd.f32 %v141, %v250
    %v252 = vpack.c.bf16 %v251, %v251
    %v254 = vlaneseq
    %v255 = vshrl.u32 %v254, 7
    %v256 = vsub.s32 0, %v255
    %v257 = vrot.slane %v80, %v256
    %v263 = vunpack.c.l.b16 %v71
    %v264 = vunpack.c.l.b16 %v72
    %v265 = vunpack.c.l.b16 %v73
    %v266 = vunpack.c.l.b16 %v74
    %v267 = vpack.c.b16 %v264, %v263
    %v268 = vpack.c.b16 %v266, %v265
    %v272 = vsel %vm102, %v252, 0
    %274 = vmatprep.subr.bf16.mxu0 0
    %275 = vmatpush1.bf16.msra.mxu0 %v267
    %276 = vmatprep.subr.bf16.mxu0 0
    %277 = vmatpush1.bf16.msra.mxu0 %v268
    %278 = vmatprep.subr.bf16.mxu0 0
    %279 = vmatpush1.bf16.msra.mxu0 0
    %280 = vmatprep.subr.bf16.mxu0 0
    %281 = vmatpush1.bf16.msra.mxu0 0
    %282 = vmatprep.subr.bf16.mxu0 0
    %283 = vmatpush1.bf16.msra.mxu0 0
    %284 = vmatprep.subr.bf16.mxu0 0
    %285 = vmatpush1.bf16.msra.mxu0 0
    %286 = vmatprep.subr.bf16.mxu0 0
    %287 = vmatpush1.bf16.msra.mxu0 0
    %288 = vmatprep.subr.bf16.mxu0 0
    %289 = vmatpush1.bf16.msra.mxu0 0
    %290 = vmatprep.subr.bf16.mxu0 0
    %291 = vmatpush1.bf16.msra.mxu0 0
    %292 = vmatprep.subr.bf16.mxu0 0
    %293 = vmatpush1.bf16.msra.mxu0 0
    %294 = vmatprep.subr.bf16.mxu0 0
    %295 = vmatpush1.bf16.msra.mxu0 0
    %296 = vmatprep.subr.bf16.mxu0 0
    %297 = vmatpush1.bf16.msra.mxu0 0
    %298 = vmatprep.subr.bf16.mxu0 0
    %299 = vmatpush1.bf16.msra.mxu0 0
    %300 = vmatprep.subr.bf16.mxu0 0
    %301 = vmatpush1.bf16.msra.mxu0 0
    %302 = vmatprep.subr.bf16.mxu0 0
    %303 = vmatpush1.bf16.msra.mxu0 0
    %304 = vmatprep.subr.bf16.mxu0 0
    %305 = vmatpush1.bf16.msra.mxu0 0
    %306 = vmatprep.mubr.bf16.mxu0 0
    %307 = vmatmul.mubr.bf16.gmra.mrb[0].mxu0 %v272
    %v308 = vpop.f32.mrb[0].mxu0
    %v309 = vadd.f32 %v257, %v308
    %v310 = vpop.f32.mrb[0].mxu0
    %v311 = vpop.f32.mrb[0].mxu0
    %v312 = vpop.f32.mrb[0].mxu0
    %313 = vdwg.mxu0
    %v314 = vand.u32 2147483647, %v309
    %vm315 = vcmp.le.f32.partialorder %v314, 0.7853982
    %vm316 = vcmp.lt.s32.totalorder %v309, 0
    %v317 = vand.u32 %v309, 2139095040
    %v318 = vshrl.u32 %v317, 23
    %v319 = vsub.s32 %v318, 127
    %v320 = vand.u32 2147483647, %v309
    %v321 = vand.u32 %v320, 8388607
    %v322 = vor.u32 %v321, 8388608
    %v323 = vsub.s32 0, %v322
    %v324 = vadd.s32 %v319, 1
    %vm325 = vcmp.gt.s32.totalorder %v324, 0
    %v326 = vsel %vm325, %v324, 0
    %v327 = vshrl.u32 %v326, 5
    %v328 = vand.u32 %v326, 31
    %v329 = vsub.s32 32, %v328
    %v330 = vshrl.u32 683565275, %v329
    %v331 = vshll.u32 683565275, %v328
    %v332 = vshrl.u32 2475754826, %v329
    %v333 = vor.u32 %v331, %v332
    %v334 = vshll.u32 2475754826, %v328
    %v335 = vshrl.u32 2131351028, %v329
    %v336 = vor.u32 %v334, %v335
    %v337 = vshll.u32 2131351028, %v328
    %v338 = vshrl.u32 2102212464, %v329
    %v339 = vor.u32 %v337, %v338
    %v340 = vshll.u32 2102212464, %v328
    %v341 = vshrl.u32 920167782, %v329
    %v342 = vor.u32 %v340, %v341
    %v343 = vshll.u32 920167782, %v328
    %v344 = vshrl.u32 1326507024, %v329
    %v345 = vor.u32 %v343, %v344
    %vm346 = vcmp.lt.s32.totalorder %v327, 1
    %vm347 = vcmp.lt.s32.totalorder %v327, 2
    %vm348 = vcmp.lt.s32.totalorder %v327, 3
    %vm349 = vcmp.lt.s32.totalorder %v327, 4
    %v350 = vsel %vm346, %v330, %v333
    %v351 = vsel %vm349, %v339, 2102212464
    %v352 = vsel %vm348, %v336, %v351
    %v353 = vsel %vm347, %v350, %v352
    %v354 = vsel %vm346, %v333, %v336
    %v355 = vsel %vm349, %v342, 920167782
    %v356 = vsel %vm348, %v339, %v355
    %v357 = vsel %vm347, %v354, %v356
    %v358 = vsel %vm346, %v336, %v339
    %v359 = vsel %vm349, %v345, 1326507024
    %v360 = vsel %vm348, %v342, %v359
    %v361 = vsel %vm347, %v358, %v360
    %v362 = vshll.u32 %v322, 8
    %v363 = vmul.u32.u64.compose %v362, %v361
    %v364 = vextract.low.u32 %v363
    %v365 = vextract.high.u32 %v363
    %v366 = vmul.u32.u64.compose %v362, %v357
    %v367 = vextract.low.u32 %v366
    %v368 = vextract.high.u32 %v366
    %v369 = vmul.u32 %v362, %v353
    %v370 = vadd.s32 %v365, %v367
    %vm371 = vc.u32 %v365, %v367
    %v372 = vadd.s32 %v368, 1
    %v373 = vsel %vm371, %v372, %v368
    %v374 = vadd.s32 %v369, %v373
    %v375 = vadd.s32 %v374, 536870912
    %v376 = vshrl.u32 %v375, 30
    %v377 = vshll.u32 %v376, 30
    %v378 = vsub.s32 %v374, %v377
    %vm379 = vcmp.lt.s32.totalorder %v378, 0
    %v380 = vsub.s32 0, %v378
    %v381 = vsel %vm379, %v380, %v378
    %v382 = vclz %v381
    %v383 = vsub.s32 %v382, 2
    %vm384 = vcmp.gt.s32.totalorder 0, %v383
    %v385 = vsel %vm384, 0, %v383
    %v386 = vsub.s32 32, %v385
    %v387 = vshll.u32 %v378, %v385
    %v388 = vshrl.u32 %v370, %v386
    %v389 = vor.u32 %v387, %v388
    %v390 = vsub.s32 4294967266, %v385
    %v391 = vadd.s32 %v390, 127
    %v392 = vshll.u32 %v391, 23
    %v393 = vor.u32 4788187, %v392
    %v394 = vand.u32 2147483647, %v393
    %v396 = vcvt.s32.f32 %v389
    %v397 = vmul.f32 %v396, %v394
    %v398 = vxor.u32 %v397, 2147483648
    %v399 = vsel %vm316, %v398, %v397
    %v400 = vsub.s32 4, %v376
    %v401 = vsel %vm316, %v400, %v376
    %v402 = vsel %vm315, %v309, %v399
    %v403 = vsel %vm315, 0, %v401
    %v404 = vcosq.f32.pop %v402
    %v405 = vsinq.f32.pop %v402
    %vm406 = vweird.f32 %v309
    %v407 = vadd.s32 %v403, 3
    %v408 = vand.u32 %v407, 3
    %vm409 = vcmp.lt.s32.totalorder %v408, 2
    %vm410 = vcmp.eq.s32.totalorder %v408, 0
    %v411 = vxor.u32 %v405, 2147483648
    %v412 = vsel %vm410, %v404, %v411
    %vm413 = vcmp.eq.s32.totalorder %v408, 2
    %v414 = vxor.u32 %v404, 2147483648
    %v415 = vsel %vm413, %v414, %v405
    %v416 = vsel %vm409, %v412, %v415
    %v417 = vsel %vm406, nan, %v416
    %v418 = vmul.f32 %v417, %v417
    %v419 = vadd.f32 %v309, %v418
    %v420 = vpack.c.bf16 %v419, %v419
    %v422 = vlaneseq
    %v423 = vshrl.u32 %v422, 7
    %v424 = vsub.s32 0, %v423
    %v425 = vrot.slane %v81, %v424
    %v431 = vunpack.c.l.b16 %v75
    %v432 = vunpack.c.l.b16 %v76
    %v433 = vunpack.c.l.b16 %v77
    %v434 = vunpack.c.l.b16 %v78
    %v435 = vpack.c.b16 %v432, %v431
    %v436 = vpack.c.b16 %v434, %v433
    %v440 = vsel %vm102, %v420, 0
    %442 = vmatprep.subr.bf16.mxu0 0
    %443 = vmatpush1.bf16.msra.mxu0 %v435
    %444 = vmatprep.subr.bf16.mxu0 0
    %445 = vmatpush1.bf16.msra.mxu0 %v436
    %446 = vmatprep.subr.bf16.mxu0 0
    %447 = vmatpush1.bf16.msra.mxu0 0
    %448 = vmatprep.subr.bf16.mxu0 0
    %449 = vmatpush1.bf16.msra.mxu0 0
    %450 = vmatprep.subr.bf16.mxu0 0
    %451 = vmatpush1.bf16.msra.mxu0 0
    %452 = vmatprep.subr.bf16.mxu0 0
    %453 = vmatpush1.bf16.msra.mxu0 0
    %454 = vmatprep.subr.bf16.mxu0 0
    %455 = vmatpush1.bf16.msra.mxu0 0
    %456 = vmatprep.subr.bf16.mxu0 0
    %457 = vmatpush1.bf16.msra.mxu0 0
    %458 = vmatprep.subr.bf16.mxu0 0
    %459 = vmatpush1.bf16.msra.mxu0 0
    %460 = vmatprep.subr.bf16.mxu0 0
    %461 = vmatpush1.bf16.msra.mxu0 0
    %462 = vmatprep.subr.bf16.mxu0 0
    %463 = vmatpush1.bf16.msra.mxu0 0
    %464 = vmatprep.subr.bf16.mxu0 0
    %465 = vmatpush1.bf16.msra.mxu0 0
    %466 = vmatprep.subr.bf16.mxu0 0
    %467 = vmatpush1.bf16.msra.mxu0 0
    %468 = vmatprep.subr.bf16.mxu0 0
    %469 = vmatpush1.bf16.msra.mxu0 0
    %470 = vmatprep.subr.bf16.mxu0 0
    %471 = vmatpush1.bf16.msra.mxu0 0
    %472 = vmatprep.subr.bf16.mxu0 0
    %473 = vmatpush1.bf16.msra.mxu0 0
    %474 = vmatprep.mubr.bf16.mxu0 0
    %475 = vmatmul.mubr.bf16.gmra.mrb[0].mxu0 %v440
    %v476 = vpop.f32.mrb[0].mxu0
    %v477 = vadd.f32 %v425, %v476
    %v478 = vpop.f32.mrb[0].mxu0
    %v479 = vpop.f32.mrb[0].mxu0
    %v480 = vpop.f32.mrb[0].mxu0
    %481 = vdwg.mxu0
    %v482 = vadd.f32 %v82, %v477
    %v483 = vand.u32 2147483647, %v482
    %vm484 = vcmp.le.f32.partialorder %v483, 0.7853982
    %vm485 = vcmp.lt.s32.totalorder %v482, 0
    %v486 = vand.u32 %v482, 2139095040
    %v487 = vshrl.u32 %v486, 23
    %v488 = vsub.s32 %v487, 127
    %v489 = vand.u32 2147483647, %v482
    %v490 = vand.u32 %v489, 8388607
    %v491 = vor.u32 %v490, 8388608
    %v492 = vsub.s32 0, %v491
    %v493 = vadd.s32 %v488, 1
    %vm494 = vcmp.gt.s32.totalorder %v493, 0
    %v495 = vsel %vm494, %v493, 0
    %v496 = vshrl.u32 %v495, 5
    %v497 = vand.u32 %v495, 31
    %v498 = vsub.s32 32, %v497
    %v499 = vshrl.u32 683565275, %v498
    %v500 = vshll.u32 683565275, %v497
    %v501 = vshrl.u32 2475754826, %v498
    %v502 = vor.u32 %v500, %v501
    %v503 = vshll.u32 2475754826, %v497
    %v504 = vshrl.u32 2131351028, %v498
    %v505 = vor.u32 %v503, %v504
    %v506 = vshll.u32 2131351028, %v497
    %v507 = vshrl.u32 2102212464, %v498
    %v508 = vor.u32 %v506, %v507
    %v509 = vshll.u32 2102212464, %v497
    %v510 = vshrl.u32 920167782, %v498
    %v511 = vor.u32 %v509, %v510
    %v512 = vshll.u32 920167782, %v497
    %v513 = vshrl.u32 1326507024, %v498
    %v514 = vor.u32 %v512, %v513
    %vm515 = vcmp.lt.s32.totalorder %v496, 1
    %vm516 = vcmp.lt.s32.totalorder %v496, 2
    %vm517 = vcmp.lt.s32.totalorder %v496, 3
    %vm518 = vcmp.lt.s32.totalorder %v496, 4
    %v519 = vsel %vm515, %v499, %v502
    %v520 = vsel %vm518, %v508, 2102212464
    %v521 = vsel %vm517, %v505, %v520
    %v522 = vsel %vm516, %v519, %v521
    %v523 = vsel %vm515, %v502, %v505
    %v524 = vsel %vm518, %v511, 920167782
    %v525 = vsel %vm517, %v508, %v524
    %v526 = vsel %vm516, %v523, %v525
    %v527 = vsel %vm515, %v505, %v508
    %v528 = vsel %vm518, %v514, 1326507024
    %v529 = vsel %vm517, %v511, %v528
    %v530 = vsel %vm516, %v527, %v529
    %v531 = vshll.u32 %v491, 8
    %v532 = vmul.u32.u64.compose %v531, %v530
    %v533 = vextract.low.u32 %v532
    %v534 = vextract.high.u32 %v532
    %v535 = vmul.u32.u64.compose %v531, %v526
    %v536 = vextract.low.u32 %v535
    %v537 = vextract.high.u32 %v535
    %v538 = vmul.u32 %v531, %v522
    %v539 = vadd.s32 %v534, %v536
    %vm540 = vc.u32 %v534, %v536
    %v541 = vadd.s32 %v537, 1
    %v542 = vsel %vm540, %v541, %v537
    %v543 = vadd.s32 %v538, %v542
    %v544 = vadd.s32 %v543, 536870912
    %v545 = vshrl.u32 %v544, 30
    %v546 = vshll.u32 %v545, 30
    %v547 = vsub.s32 %v543, %v546
    %vm548 = vcmp.lt.s32.totalorder %v547, 0
    %v549 = vsub.s32 0, %v547
    %v550 = vsel %vm548, %v549, %v547
    %v551 = vclz %v550
    %v552 = vsub.s32 %v551, 2
    %vm553 = vcmp.gt.s32.totalorder 0, %v552
    %v554 = vsel %vm553, 0, %v552
    %v555 = vsub.s32 32, %v554
    %v556 = vshll.u32 %v547, %v554
    %v557 = vshrl.u32 %v539, %v555
    %v558 = vor.u32 %v556, %v557
    %v559 = vsub.s32 4294967266, %v554
    %v560 = vadd.s32 %v559, 127
    %v561 = vshll.u32 %v560, 23
    %v562 = vor.u32 4788187, %v561
    %v563 = vand.u32 2147483647, %v562
    %v565 = vcvt.s32.f32 %v558
    %v566 = vmul.f32 %v565, %v563
    %v567 = vxor.u32 %v566, 2147483648
    %v568 = vsel %vm485, %v567, %v566
    %v569 = vsub.s32 4, %v545
    %v570 = vsel %vm485, %v569, %v545
    %v571 = vsel %vm484, %v482, %v568
    %v572 = vsel %vm484, 0, %v570
    %v573 = vcosq.f32.pop %v571
    %v574 = vsinq.f32.pop %v571
    %vm575 = vweird.f32 %v482
    %v576 = vadd.s32 %v572, 3
    %v577 = vand.u32 %v576, 3
    %vm578 = vcmp.lt.s32.totalorder %v577, 2
    %vm579 = vcmp.eq.s32.totalorder %v577, 0
    %v580 = vxor.u32 %v574, 2147483648
    %v581 = vsel %vm579, %v573, %v580
    %vm582 = vcmp.eq.s32.totalorder %v577, 2
    %v583 = vxor.u32 %v573, 2147483648
    %v584 = vsel %vm582, %v583, %v574
    %v585 = vsel %vm578, %v581, %v584
    %v586 = vsel %vm575, nan, %v585
    %v587 = vmul.f32 %v586, %v586
    %v588 = vadd.f32 %v482, %v587
    %589 = vst.msk [vmem:[#allocation8] sm:$0xff] %vm102, %v588
    // Predicated region
    $region42: #{tpu_custom_call.1} parent=1 // pred_check
      _
    $region43: #{tpu_custom_call.1} parent=1 // pred_check_branch
      %591 = sbr.rel (0) target = $region45
    $region44: #{tpu_custom_call.1} parent=1 // pred_region
      %s593 = ssub.s32 128, 128
      %594 = vsyncadd [#allocation4], %s593
      %s596 = sshll.u32 [#allocation8], 4
      %s597 = int_to_ptr.vmem [resolvable:$true] %s596
      %599 = dma.vmem_to_hbm [thread:$0]  %s597, 128, %s7, [#allocation4]
    $region45: #{tpu_custom_call.1} parent=1 // pred_fallthru
      _
    // Predicated region
    $region46: #{tpu_custom_call.1} parent=1 // pred_check
      _
    $region47: #{tpu_custom_call.1} parent=1 // pred_check_branch
      %601 = sbr.rel (0) target = $region49
    $region48: #{tpu_custom_call.1} parent=1 // pred_region
      %602 = dma.done [#allocation4], 128
    $region49: #{tpu_custom_call.1} parent=1 // pred_fallthru
      _
    %603 = vsyncpa [#allocation3], 1
    %604 = vsyncpa [#allocation6], 1
    %605 = vsyncpa [#allocation4], 1

</llo_original>
